<compile_context>
chip_gen: v6e
topology: v6e:2x2x1
jax: 0.10.0
libtpu: 0.0.40
codegen_flags: <defaults>
</compile_context>

<pallas_src>
import functools

import jax
import jax.numpy as jnp
from jax import lax
from jax.experimental import pallas as pl
from jax.experimental.pallas import tpu as pltpu


_LANE = 128


def _round_up(x, m):
    return (x + m - 1) // m * m


# ---------------------------------------------------------------------------
# pltpu.roll direction probe (memoized).
# The kernel needs rolled[p] = spk[p + s].  Under jnp.roll convention
# (out[p] = x[(p - shift) % N]) that is shift = N - s; under the opposite
# convention it is shift = s.  Resolve the convention once at runtime with a
# tiny kernel instead of hard-coding an assumption.
# ---------------------------------------------------------------------------
_ROLL_JNP_CONVENTION = None


def _roll_matches_jnp():
    global _ROLL_JNP_CONVENTION
    if _ROLL_JNP_CONVENTION is None:
        def k(x_ref, o_ref):
            o_ref[...] = pltpu.roll(x_ref[...], 1, axis=1)

        x = jnp.tile(jnp.arange(_LANE, dtype=jnp.float32)[None, :], (8, 1))
        y = pl.pallas_call(
            k, out_shape=jax.ShapeDtypeStruct((8, _LANE), jnp.float32))(x)
        _ROLL_JNP_CONVENTION = bool(
            jax.device_get(y)[0, 0] == float(_LANE - 1))
    return _ROLL_JNP_CONVENTION


def _spk_downsample_kernel(x_ref, w_ref, scale_ref, shift_ref, o_ref, v_ref,
                           *, v_threshold, roll_shifts, compute_dtype):
    """One grid step = one batch block x ONE timestep.

    x_ref    : VMEM (1, C, NL)     raw padded input for this (block, t), f32
    w_ref    : VMEM (KK, Cout, C)  per-tap conv weight matrices, compute_dtype
    scale_ref: VMEM (1, Cout, 1)   fused per-(t, ch) scale (tsmp * bn_scale), f32
    shift_ref: VMEM (1, Cout, 1)   fused per-(t, ch) shift (bias/BN folded), f32
    o_ref    : VMEM (1, Cout, NL)  conv output at padded-input resolution, f32
    v_ref    : VMEM (C, NL)        IF membrane potential (persists across t), f32
    """
    @pl.when(pl.program_id(1) == 0)                 # first timestep of this block
    def _():
        v_ref[...] = jnp.zeros_like(v_ref)

    # --- IF neuron: integrate, fire, fused hard reset (v_reset = 0) ----------
    v = v_ref[...] + x_ref[0]                       # (C, NL) f32, exact
    fired = v >= v_threshold
    v_ref[...] = jnp.where(fired, 0.0, v)           # fused reset (1 select)
    spk = fired.astype(compute_dtype)               # 0/1 is exact in bf16

    # --- 3x3 / stride-2 conv as 9 shifted (Cout, C) @ (C, NL) matmuls --------
    # For sample n / output pixel (i, j) the valid result lives at lane
    # n*SP + stride*i*Wp + stride*j; tap (kh, kw) needs the spike at that lane
    # plus kh*Wp + kw, which pltpu.roll brings into place (XLU slot, slack).
    # K = C is small at these channel counts, but the MXU is idle here anyway;
    # at real channel counts K = C is full-depth.
    acc = jnp.zeros(o_ref.shape[1:], jnp.float32)   # (Cout, NL) f32 accumulator
    for k, rs in enumerate(roll_shifts):
        rhs = spk if rs == 0 else pltpu.roll(spk, rs, axis=1)
        acc = acc + jnp.dot(w_ref[k], rhs, preferred_element_type=jnp.float32)

    # --- fused epilogue: conv bias + TSM per-t scale + eval-mode BN -----------
    o_ref[0] = acc * scale_ref[0] + shift_ref[0]    # lane-dense (NL % 128 == 0) store


def _vmem_budget_bytes():
    """Generation-aware VMEM budget: half of physical capacity (per-TC headroom)."""
    try:
        cap = int(pltpu.get_tpu_info().vmem_capacity_bytes)
    except Exception:
        cap = 64 << 20                              # v7x per-core physical; safe everywhere
    return max(cap // 2, 16 << 20)


def _pick_block_b(batch, bytes_per_sample, budget, cap):
    """Largest nb <= cap dividing `batch` whose VMEM residency fits the budget."""
    best = 1
    for nb in range(1, max(1, min(batch, cap)) + 1):
        if batch % nb == 0 and nb * bytes_per_sample <= budget:
            best = nb
    return best


def spk_downsample(x, conv_weight, conv_bias, tsmp,
                   bn_gamma, bn_beta, bn_mean, bn_var,
                   temb=None, *,
                   stride=2, padding=1, v_threshold=1.0, bn_eps=1e-5,
                   compute_dtype=jnp.bfloat16, block_b=None):
    """Pallas implementation of Spk_DownSample.forward.

    x: (T, B, C, H, W) -> (T, B, C, H', W'),  H' = (H + 2*padding - KH)//stride + 1.
    `temb` is accepted for signature parity with the PyTorch module but unused.
    """
    del temb                                        # unused by the reference forward
    T, B, C, H, W = x.shape
    Cout, Cin, KH, KW = conv_weight.shape
    assert Cin == C and Cout == C, "Spk_DownSample uses in_ch == out_ch"
    # The IF neuron runs on the *padded* input inside the kernel; padded zeros
    # must never fire for this to match the reference (which pads after the
    # neuron), i.e. the threshold must be positive.
    assert v_threshold > 0.0, "kernel requires v_threshold > 0"
    Ho = (H + 2 * padding - KH) // stride + 1
    Wo = (W + 2 * padding - KW) // stride + 1
    Hp, Wp = H + 2 * padding, W + 2 * padding
    SP = _round_up(Hp * Wp, _LANE)                  # per-sample spatial, lane-padded

    # ---- host-side glue: pure layout plumbing, NO 9x im2col expansion --------
    x32 = x.astype(jnp.float32)                     # IF math stays f32 (exact)
    xp = jnp.pad(x32, ((0, 0), (0, 0), (0, 0),
                       (padding, padding), (padding, padding)))
    xp = xp.reshape(T, B, C, Hp * Wp)
    xp = jnp.pad(xp, ((0, 0), (0, 0), (0, 0), (0, SP - Hp * Wp)))
    xl = jnp.transpose(xp, (0, 2, 1, 3)).reshape(T, C, B * SP)   # samples on lanes

    # per-tap weight matrices: w9[kh*KW + kw] = W[:, :, kh, kw]  (bf16 for MXU;
    # deliberate, tolerance-tested deviation from the f32 PyTorch conv).
    w9 = jnp.transpose(conv_weight, (2, 3, 0, 1)).reshape(KH * KW, Cout, Cin)
    w9 = w9.astype(compute_dtype)

    # fold conv bias + per-timestep TSM scale + eval-mode BN into one affine.
    # TODO(synk): training-mode BatchNorm (batch statistics over T*B*H'*W') is
    # not fused; this implements eval-mode BN (running stats folded in).
    bn_scale = bn_gamma.astype(jnp.float32) * lax.rsqrt(bn_var.astype(jnp.float32) + bn_eps)
    bn_shift = bn_beta.astype(jnp.float32) - bn_mean.astype(jnp.float32) * bn_scale
    ts = tsmp.reshape(T).astype(jnp.float32)
    scale_tc = (ts[:, None] * bn_scale[None, :]).reshape(T, Cout, 1)
    shift_tc = (conv_bias.astype(jnp.float32)[None, :] * ts[:, None] * bn_scale[None, :]
                + bn_shift[None, :]).reshape(T, Cout, 1)

    # ---- block-size / grid selection ------------------------------------------
    budget = _vmem_budget_bytes()
    # per-sample VMEM residency: double-buffered in & out blocks + membrane scratch
    per_sample = SP * 4 * (2 * C + 2 * Cout + C)
    nb = block_b if block_b is not None else _pick_block_b(
        B, per_sample, budget, cap=max(1, B // 2))  # keep >= 2 batch steps (v7x megacore)
    assert B % nb == 0
    NL = nb * SP                                    # lane width per block (mult. of 128)

    # roll amounts realizing rolled[p] = spk[p + kh*Wp + kw]
    jnp_conv = _roll_matches_jnp()
    roll_shifts = tuple(
        ((NL - (kh * Wp + kw)) % NL) if jnp_conv else ((kh * Wp + kw) % NL)
        for kh in range(KH) for kw in range(KW))

    kern = functools.partial(_spk_downsample_kernel,
                             v_threshold=float(v_threshold),
                             roll_shifts=roll_shifts,
                             compute_dtype=compute_dtype)

    flops = 2 * T * B * Cout * Cin * KH * KW * SP
    bytes_accessed = xl.size * 4 + T * Cout * B * SP * 4 + w9.size * 2

    ow = pl.pallas_call(
        kern,
        out_shape=jax.ShapeDtypeStruct((T, Cout, B * SP), jnp.float32),
        grid_spec=pltpu.PrefetchScalarGridSpec(
            num_scalar_prefetch=0,
            grid=(B // nb, T),                       # (batch blocks, timesteps)
            in_specs=[
                pl.BlockSpec((1, C, NL), lambda i, t: (t, 0, i)),          # padded input
                pl.BlockSpec((KH * KW, Cout, Cin), lambda i, t: (0, 0, 0)),  # per-tap weights
                pl.BlockSpec((1, Cout, 1), lambda i, t: (t, 0, 0)),        # fused scale
                pl.BlockSpec((1, Cout, 1), lambda i, t: (t, 0, 0)),        # fused shift
            ],
            out_specs=pl.BlockSpec((1, Cout, NL), lambda i, t: (t, 0, i)),
            scratch_shapes=[pltpu.VMEM((C, NL), jnp.float32)],             # IF membrane
        ),
        compiler_params=pltpu.CompilerParams(
            dimension_semantics=("parallel", "arbitrary"),  # batch ||, time sequential
            vmem_limit_bytes=budget),
        cost_estimate=pl.CostEstimate(flops=flops, transcendentals=0,
                                      bytes_accessed=bytes_accessed),
    )(xl, w9, scale_tc, shift_tc)

    # ---- cheap XLA plumbing: stride-compaction of valid outputs + NCHW permute
    y = ow.reshape(T, Cout, B, SP)[..., :Hp * Wp].reshape(T, Cout, B, Hp, Wp)
    y = y[:, :, :, 0:stride * Ho:stride, 0:stride * Wo:stride]   # valid conv outputs
    return jnp.transpose(y, (0, 2, 1, 3, 4))                     # (T, B, Cout, Ho, Wo)


def _reference_forward(x, w, b, tsmp, gamma, beta, mean, var,
                       *, stride, padding, vth, eps):
    """Plain-JAX replica of the PyTorch forward (IF neuron + conv + tsmp + eval BN)."""
    T, B, C, H, W = x.shape

    def step(v, xt):
        h = v + xt
        s = (h >= vth).astype(x.dtype)
        return h * (1.0 - s), s

    _, spk = lax.scan(step, jnp.zeros_like(x[0]), x)              # (T, B, C, H, W)
    y = lax.conv_general_dilated(
        spk.reshape(T * B, C, H, W), w, (stride, stride),
        [(padding, padding), (padding, padding)],
        dimension_numbers=("NCHW", "OIHW", "NCHW"))
    y = y + b[None, :, None, None]
    Cout, Ho, Wo = y.shape[1], y.shape[2], y.shape[3]
    y = (y.reshape(T, B, Cout, Ho, Wo) * tsmp.reshape(T, 1, 1, 1, 1)).reshape(T * B, Cout, Ho, Wo)
    inv = gamma * lax.rsqrt(var + eps)
    y = (y - mean[None, :, None, None]) * inv[None, :, None, None] + beta[None, :, None, None]
    return y.reshape(T, B, Cout, Ho, Wo)


if __name__ == "__main__":
    T, B = 4, 2            # module default timestep = 4
    C = 4                  # Spk_DownSample: in_ch == out_ch
    H = W = 16
    K, stride, padding = 3, 2, 1
    vth, eps = 1.0, 1e-5   # global_thres, BN eps

    key = jax.random.PRNGKey(0)
    kx, kw, kb, kt, kg, kbe, km, kv = jax.random.split(key, 8)

    x = jax.random.normal(kx, (T, B, C, H, W), jnp.float32) * 0.8 + 0.3

    # xavier_uniform-like conv weight (module init); non-trivial bias/tsmp/BN to
    # actually exercise the fused epilogue (module inits bias=0, tsmp=1).
    bound = (6.0 / (C * K * K + C * K * K)) ** 0.5
    weight = jax.random.uniform(kw, (C, C, K, K), jnp.float32, -bound, bound)
    bias = 0.05 * jax.random.normal(kb, (C,), jnp.float32)
    tsmp = 1.0 + 0.1 * jax.random.normal(kt, (T, 1, 1, 1, 1), jnp.float32)
    bn_gamma = 1.0 + 0.2 * jax.random.normal(kg, (C,), jnp.float32)
    bn_beta = 0.1 * jax.random.normal(kbe, (C,), jnp.float32)
    bn_mean = 0.1 * jax.random.normal(km, (C,), jnp.float32)
    bn_var = jax.random.uniform(kv, (C,), jnp.float32, 0.5, 1.5)

    y = jax.block_until_ready(spk_downsample(
        x, weight, bias, tsmp, bn_gamma, bn_beta, bn_mean, bn_var,
        stride=stride, padding=padding, v_threshold=vth, bn_eps=eps))

    assert y.shape == (T, B, C, H // 2, W // 2) and y.dtype == jnp.float32

    # (1) apples-to-apples: reference with the bf16-rounded weights the MXU consumes
    #     (the IF neuron itself is exact f32 in the kernel, so this is tight).
    w_bf = weight.astype(jnp.bfloat16).astype(jnp.float32)
    y_ref_bf = _reference_forward(x, w_bf, bias, tsmp, bn_gamma, bn_beta, bn_mean, bn_var,
                                  stride=stride, padding=padding, vth=vth, eps=eps)
    assert jnp.allclose(y, y_ref_bf, atol=1e-3, rtol=1e-3)

    # (2) against the exact f32 module semantics (loose tol for bf16 weight rounding)
    y_ref = _reference_forward(x, weight, bias, tsmp, bn_gamma, bn_beta, bn_mean, bn_var,
                               stride=stride, padding=padding, vth=vth, eps=eps)
    assert jnp.allclose(y, y_ref, atol=5e-2, rtol=5e-2)

    print("KERNEL_OK")
</pallas_src>

<mosaic_0001>
module attributes {stable_mosaic.version = 11 : i64} {
  func.func @k(%arg0: memref<8x128xf32, #tpu.memory_space<vmem>>, %arg1: memref<8x128xf32, #tpu.memory_space<vmem>>) attributes {dimension_semantics = [], scalar_prefetch = 0 : i64, scratch_operands = 0 : i64, tpu.core_type = #tpu.core_type<tc>} {
    %c0 = arith.constant 0 : index
    %c0_0 = arith.constant 0 : index
    %0 = vector.load %arg0[%c0, %c0_0] : memref<8x128xf32, #tpu.memory_space<vmem>>, vector<8x128xf32>
    %c1_i32 = arith.constant 1 : i32
    %1 = tpu.dynamic_rotate %0 by %c1_i32 dim 1 : vector<8x128xf32>, i32 -> vector<8x128xf32>
    %c0_1 = arith.constant 0 : index
    %c0_2 = arith.constant 0 : index
    %2 = vector.load %arg1[%c0_1, %c0_2] : memref<8x128xf32, #tpu.memory_space<vmem>>, vector<8x128xf32>
    tpu.vector_store %arg1[%c0_1, %c0_2], %1 {strides = array<i32>} : memref<8x128xf32, #tpu.memory_space<vmem>>, vector<8x128xf32>,
    return
  }
}

</mosaic_0001>

<llo_original>
// kernel: tpu_custom_call.1
$region0: #{tpu_custom_call.1}
  #allocation0 [shape = 'u32[]', space=smem, size = 0x4, offset = 0x4, fixed_abs, tag = 'smem constant byte address 0x4 - core index']
  #allocation1 [shape = 'u32[144,128]{1,0:T(1,128)}', space=vmem, size = 0x12000, scoped, tag = 'internal scratch']
  %s0 = inlined_call_operand.hbm [shape: f32[8,128], index: 0, kind: input, shape index: {}]
  %s1 = inlined_call_operand.hbm [shape: f32[8,128], index: 1, kind: output, shape index: {}]
  %s2 = sld [smem:[#allocation0]]
  $region18: #{tpu_custom_call.1} parent=0
    _
  %s4 = ssub.s32 1, %s2
  %s5 = scalar_select 0, %s4, %s2
  $region1: #{tpu_custom_call.1} parent=0
    #allocation2 [shape = 'u8[4096]{0}', space=vmem, size = 0x1000, scoped, tag = 'input window, operand 0, single buffered']
    #allocation3 [shape = 's32[1]{0}', space=sflag, size = 0x4, scoped, tag = 'scoped memory for tpu_custom_call.1']
    #allocation4 [shape = 's32[1]{0}', space=sflag, size = 0x4, scoped, tag = 'scoped memory for tpu_custom_call.1']
    #allocation5 [shape = 'u8[4096]{0}', space=vmem, size = 0x1000, scoped, tag = 'output window, operand 0, single buffered']
    %6 = vsyncpa [#allocation3], 0
    %7 = vsyncpa [#allocation4], 0
    // Predicated region
    $region2: #{tpu_custom_call.1} parent=1 // pred_check
      _
    $region3: #{tpu_custom_call.1} parent=1 // pred_check_branch
      %9 = sbr.rel (0) target = $region5
    $region4: #{tpu_custom_call.1} parent=1 // pred_region
      %s11 = ssub.s32 128, 128
      %12 = vsyncadd [#allocation3], %s11
      %s14 = sshll.u32 [#allocation2], 4
      %s15 = int_to_ptr.vmem [resolvable:$true] %s14
      %17 = dma.hbm_to_vmem [thread:$0]  %s0, 128, %s15, [#allocation3]
    $region5: #{tpu_custom_call.1} parent=1 // pred_fallthru
      _
    // Predicated region
    $region6: #{tpu_custom_call.1} parent=1 // pred_check
      _
    $region7: #{tpu_custom_call.1} parent=1 // pred_check_branch
      %19 = sbr.rel (0) target = $region9
    $region8: #{tpu_custom_call.1} parent=1 // pred_region
      %20 = dma.done [#allocation3], 128
    $region9: #{tpu_custom_call.1} parent=1 // pred_fallthru
      _
    %v21 = vld [vmem:[#allocation2] sm:$0xff]
    %22 = vrot.lane.b32.xlu0 %v21, 1
    %v23 = vpop.permute.xlu0 %22
    %24 = vst [vmem:[#allocation5] sm:$0xff] %v23
    // Predicated region
    $region10: #{tpu_custom_call.1} parent=1 // pred_check
      _
    $region11: #{tpu_custom_call.1} parent=1 // pred_check_branch
      %26 = sbr.rel (0) target = $region13
    $region12: #{tpu_custom_call.1} parent=1 // pred_region
      %s28 = ssub.s32 128, 128
      %29 = vsyncadd [#allocation4], %s28
      %s31 = sshll.u32 [#allocation5], 4
      %s32 = int_to_ptr.vmem [resolvable:$true] %s31
      %34 = dma.vmem_to_hbm [thread:$0]  %s32, 128, %s1, [#allocation4]
    $region13: #{tpu_custom_call.1} parent=1 // pred_fallthru
      _
    // Predicated region
    $region14: #{tpu_custom_call.1} parent=1 // pred_check
      _
    $region15: #{tpu_custom_call.1} parent=1 // pred_check_branch
      %36 = sbr.rel (0) target = $region17
    $region16: #{tpu_custom_call.1} parent=1 // pred_region
      %37 = dma.done [#allocation4], 128
    $region17: #{tpu_custom_call.1} parent=1 // pred_fallthru
      _
    %38 = vsyncpa [#allocation3], 1
    %39 = vsyncpa [#allocation4], 1

</llo_original>
